<compile_context>
chip_gen: v7x
topology: tpu7x:2x2x1
jax: 0.10.0
libtpu: 0.0.40
codegen_flags: <defaults>
</compile_context>

<pallas_src>
import functools

import jax
import jax.numpy as jnp
from jax.experimental import pallas as pl
from jax.experimental.pallas import tpu as pltpu

EPS = 1e-6


def _round_up(n, m):
    return ((n + m - 1) // m) * m


def probe_kernel(x_ref, w_ref, b_ref, o_ref, sum_ref, *,
                 n_tokens, token_tile, needs_mask, inv_patches, inv_batch, eps):
    t = pl.program_id(0)
    nt = pl.num_programs(0)

    # Partial token sum of this tile, accumulated in f32 (x may arrive as bf16).
    # Single consumer chain -> the cast fuses into the reduction, no full f32 tile copy.
    x32 = x_ref[...].astype(jnp.float32)                # [B, tT, D]
    if needs_mask:
        # grid = cdiv(T, tT): the tail of the LAST block maps past T and its VMEM
        # contents are undefined, so zero it before the reduce.  For interior tiles the
        # compare is all-true (cheap VPU select); this branch is compiled out entirely
        # when T % tT == 0.
        tok = jax.lax.broadcasted_iota(jnp.int32, (1, token_tile, 1), 1)
        x32 = jnp.where(tok < (n_tokens - t * token_tile), x32, 0.0)
    tile_sum = jnp.sum(x32, axis=1)                     # [B, D]

    @pl.when(t == 0)
    def _init():
        # Token 0 (CLS) lives in tile 0: subtract it once instead of slicing
        # x[:, 1:, :] (which would force a sublane-misaligned VMEM copy).
        cls_row = x_ref[:, 0, :].astype(jnp.float32)    # narrow [B, D] load
        sum_ref[...] = tile_sum - cls_row

    @pl.when(t > 0)
    def _accumulate():
        sum_ref[...] = sum_ref[...] + tile_sum

    @pl.when(t == nt - 1)
    def _finalize():
        # Mean over the ORIGINAL patch-token count; precomputed reciprocals, no divides.
        feats = sum_ref[...] * inv_patches              # [B, D]

        # BatchNorm1d(affine=False, eps) with training-mode batch statistics:
        # full-batch mean, biased variance, no scale/shift.  All in f32.
        mu = jnp.sum(feats, axis=0, keepdims=True) * inv_batch          # [1, D]
        centered = feats - mu
        var = jnp.sum(centered * centered, axis=0, keepdims=True) * inv_batch
        inv_std = jax.lax.rsqrt(var + eps)              # [1, D]  (EUP)

        # Single MXU pass on the already-live centered tensor.  Keep W in its native
        # dtype; if W is low precision (bf16) cast the tiny [B, D] lhs down instead so
        # the MXU runs in fast mode and no f32 copy of W is materialized in VMEM.
        lhs = centered * inv_std                        # [B, D]
        if w_ref.dtype != jnp.float32:
            lhs = lhs.astype(w_ref.dtype)
        logits = jnp.dot(lhs, w_ref[...], preferred_element_type=jnp.float32)  # [B, Cp]
        o_ref[...] = (logits + b_ref[...].astype(jnp.float32)).astype(o_ref.dtype)


def old_linear_probe_forward(x, w, b, *, token_tile=None):
    """Classification head of OldLinearProbe (MAE branch, global_pool='avg').

    x: [B, T, D] encoder token features (CLS at index 0), f32 or bf16.
    w: [D, C] linear weight (pre-transposed vs torch's [C, D]); b: [1, C] bias.
    Returns [B, C] float32 logits.
    """
    B, T, D = x.shape
    Dw, C = w.shape
    assert Dw == D and b.shape == (1, C)
    assert T >= 2, "need at least one patch token besides the CLS token"

    # Lane-dense output: pad the class dim to a multiple of 128 so stores are unmasked.
    # (w/b are tiny relative to x; this pad is negligible.)
    Cp = _round_up(C, 128)
    if Cp != C:
        w = jnp.pad(w, ((0, 0), (0, Cp - C)))
        b = jnp.pad(b, ((0, 0), (0, Cp - C)))

    x_item = jnp.dtype(x.dtype).itemsize
    w_item = jnp.dtype(w.dtype).itemsize
    b_item = jnp.dtype(b.dtype).itemsize

    # Generation-aware VMEM capacity (128 MiB on v5e/v6e, 64 MiB on v7x).
    try:
        vmem_cap = int(pltpu.get_tpu_info().vmem_capacity_bytes)
    except Exception:  # pragma: no cover - conservative fallback
        vmem_cap = 64 << 20
    usable = (vmem_cap * 85) // 100                     # headroom for compiler scratch

    # Single-buffered residents (w/b/out use pl.Buffered(1)) + pooled-sum scratch + slack.
    resident = (D * Cp * w_item + Cp * b_item + B * Cp * 4 + B * D * 4 + (2 << 20))

    # Token-axis tile: largest multiple of the sublane quantum whose double-buffered
    # block fits next to the residents on THIS generation's VMEM.
    sub = max(8, 32 // x_item)                          # 8 for f32, 16 for bf16
    if token_tile is not None:
        tt = max(sub, _round_up(int(token_tile), sub))
    else:
        x_budget = usable - resident                    # double-buffered x-tile budget
        tt = (max(0, x_budget) // max(1, 2 * B * D * x_item)) // sub * sub
    if tt >= T:
        tt = T                                          # one tile covering the full token axis
    elif tt < sub:
        # TODO(synk): fall back to a feature-dim (D) grid split (safe for per-feature BN
        #             stats) instead of failing when B*D is too large for this VMEM part.
        raise ValueError(
            f"minimum double-buffered token tile ({2 * B * sub * D * x_item} B) plus "
            f"residents ({resident} B) does not fit in usable VMEM ({usable} B)")

    grid_t = pl.cdiv(T, tt)
    needs_mask = (T % tt) != 0

    # Honest VMEM accounting: 2x double-buffered x tile + single-buffered residents.
    vmem_bytes = 2 * B * tt * D * x_item + resident
    vmem_limit = int(min(max(vmem_bytes, 16 << 20), (vmem_cap * 9) // 10))

    kernel = functools.partial(
        probe_kernel,
        n_tokens=T,
        token_tile=tt,
        needs_mask=needs_mask,
        inv_patches=1.0 / float(T - 1),                 # mean uses the ORIGINAL token count
        inv_batch=1.0 / float(B),
        eps=EPS,
    )

    out = pl.pallas_call(
        kernel,
        out_shape=jax.ShapeDtypeStruct((B, Cp), jnp.float32),
        grid_spec=pltpu.PrefetchScalarGridSpec(
            num_scalar_prefetch=0,
            grid=(grid_t,),
            in_specs=[
                # Pipelined token tiles: the only big HBM stream.
                pl.BlockSpec((B, tt, D), lambda t: (0, t, 0)),
                # Residents never change across the grid -> single-buffer them.
                pl.BlockSpec((D, Cp), lambda t: (0, 0), pipeline_mode=pl.Buffered(1)),
                pl.BlockSpec((1, Cp), lambda t: (0, 0), pipeline_mode=pl.Buffered(1)),
            ],
            out_specs=pl.BlockSpec((B, Cp), lambda t: (0, 0),
                                   pipeline_mode=pl.Buffered(1)),   # written on last step only
            scratch_shapes=[pltpu.VMEM((B, D), jnp.float32)],       # pooled-sum accumulator
        ),
        compiler_params=pltpu.CompilerParams(
            dimension_semantics=("arbitrary",),         # token axis is a reduction
            vmem_limit_bytes=vmem_limit,
        ),
    )(x, w, b)
    return out[:, :C]


def reference_forward(x, w, b):
    feats = jnp.mean(x[:, 1:, :].astype(jnp.float32), axis=1)
    mu = jnp.mean(feats, axis=0, keepdims=True)
    var = jnp.mean((feats - mu) ** 2, axis=0, keepdims=True)
    normed = (feats - mu) / jnp.sqrt(var + EPS)
    return normed @ w.astype(jnp.float32) + b.astype(jnp.float32)


if __name__ == "__main__":
    # Small shapes consistent with the module: batch=8, 1 CLS + 8 patch tokens,
    # feature_dim (cfg.dim) = 32, num_classes = 4.
    B, T, D, C = 8, 9, 32, 4

    key = jax.random.PRNGKey(0)
    kx, kw, kb = jax.random.split(key, 3)

    # Synthetic "encoder output" features (stand-in for backbone.forward_encoder(x)).
    x = jax.random.normal(kx, (B, T, D), dtype=jnp.float32)

    # Deterministic head params: Linear(D -> C), stored as [D, C] (+ bias [1, C]).
    limit = 1.0 / jnp.sqrt(jnp.float32(D))
    w = jax.random.uniform(kw, (D, C), jnp.float32, -limit, limit)
    b = jax.random.uniform(kb, (1, C), jnp.float32, -limit, limit)

    # token_tile=8 with T=9 -> grid=(2,), T % tt != 0: exercises the tiled
    # accumulate/finalize path AND the in-kernel tail masking of the last block.
    out = old_linear_probe_forward(x, w, b, token_tile=8)
    out = jax.block_until_ready(out)

    ref = reference_forward(x, w, b)
    assert out.shape == (B, C)
    assert jnp.allclose(out, ref, atol=2e-4, rtol=2e-4), "mismatch vs reference"

    print("KERNEL_OK")
</pallas_src>

<mosaic_0001>
module attributes {stable_mosaic.version = 11 : i64} {
  func.func @probe_kernel(%arg0: i32, %arg1: memref<8x8x32xf32, #tpu.memory_space<vmem>>, %arg2: memref<32x128xf32, #tpu.memory_space<vmem>>, %arg3: memref<1x128xf32, #tpu.memory_space<vmem>>, %arg4: memref<8x128xf32, #tpu.memory_space<vmem>>, %arg5: memref<8x32xf32, #tpu.memory_space<vmem>>) attributes {dimension_semantics = [#tpu.dimension_semantics<arbitrary>], iteration_bounds = array<i64: 2>, scalar_prefetch = 0 : i64, scratch_operands = 1 : i64, tpu.core_type = #tpu.core_type<tc>, window_params = [{transform_indices = @transform_0, window_bounds = array<i64: 8, 8, 32>}, {pipeline_mode = #tpu.pipeline_mode<synchronous>, transform_indices = @transform_1, window_bounds = array<i64: 32, 128>}, {pipeline_mode = #tpu.pipeline_mode<synchronous>, transform_indices = @transform_2, window_bounds = array<i64: 1, 128>}, {pipeline_mode = #tpu.pipeline_mode<synchronous>, transform_indices = @transform_3, window_bounds = array<i64: 8, 128>}]} {
    %c0 = arith.constant 0 : index
    %c0_0 = arith.constant 0 : index
    %c0_1 = arith.constant 0 : index
    %0 = vector.load %arg1[%c0, %c0_0, %c0_1] : memref<8x8x32xf32, #tpu.memory_space<vmem>>, vector<8x8x32xf32>
    %1 = tpu.iota {dimensions = array<i32: 1>} : vector<1x8x1xi32>
    %c8_i32 = arith.constant 8 : i32
    %2 = arith.muli %arg0, %c8_i32 : i32
    %c9_i32 = arith.constant 9 : i32
    %3 = arith.subi %c9_i32, %2 : i32
    %4 = vector.broadcast %3 : i32 to vector<1x8x1xi32>
    %5 = arith.cmpi slt, %1, %4 : vector<1x8x1xi32>
    %cst = arith.constant 0.000000e+00 : f32
    %6 = vector.shape_cast %5 : vector<1x8x1xi1> to vector<1x8x1xi1>
    %7 = vector.broadcast %6 : vector<1x8x1xi1> to vector<8x8x32xi1>
    %8 = vector.broadcast %cst : f32 to vector<8x8x32xf32>
    %9 = arith.select %7, %0, %8 : vector<8x8x32xi1>, vector<8x8x32xf32>
    %cst_2 = arith.constant dense<0.000000e+00> : vector<8x32xf32>
    %10 = vector.multi_reduction <add>, %9, %cst_2 [1] : vector<8x8x32xf32> to vector<8x32xf32>
    %c0_i32 = arith.constant 0 : i32
    %11 = arith.cmpi eq, %arg0, %c0_i32 : i32
    %12 = arith.extui %11 : i1 to i32
    %c0_i32_3 = arith.constant 0 : i32
    %13 = arith.cmpi ne, %12, %c0_i32_3 : i32
    scf.if %13 {
      %c0_7 = arith.constant 0 : index
      %c0_8 = arith.constant 0 : index
      %c0_9 = arith.constant 0 : index
      %20 = vector.load %arg1[%c0_7, %c0_8, %c0_9] : memref<8x8x32xf32, #tpu.memory_space<vmem>>, vector<8x1x32xf32>
      %21 = vector.shape_cast %20 : vector<8x1x32xf32> to vector<8x32xf32>
      %22 = arith.subf %10, %21 : vector<8x32xf32>
      %c0_10 = arith.constant 0 : index
      %c0_11 = arith.constant 0 : index
      %23 = vector.load %arg5[%c0_10, %c0_11] : memref<8x32xf32, #tpu.memory_space<vmem>>, vector<8x32xf32>
      tpu.vector_store %arg5[%c0_10, %c0_11], %22 {strides = array<i32>} : memref<8x32xf32, #tpu.memory_space<vmem>>, vector<8x32xf32>,
    } else {
    }
    %c0_i32_4 = arith.constant 0 : i32
    %14 = arith.cmpi sgt, %arg0, %c0_i32_4 : i32
    %15 = arith.extui %14 : i1 to i32
    %c0_i32_5 = arith.constant 0 : i32
    %16 = arith.cmpi ne, %15, %c0_i32_5 : i32
    scf.if %16 {
      %c0_7 = arith.constant 0 : index
      %c0_8 = arith.constant 0 : index
      %20 = vector.load %arg5[%c0_7, %c0_8] : memref<8x32xf32, #tpu.memory_space<vmem>>, vector<8x32xf32>
      %21 = arith.addf %20, %10 : vector<8x32xf32>
      %c0_9 = arith.constant 0 : index
      %c0_10 = arith.constant 0 : index
      %22 = vector.load %arg5[%c0_9, %c0_10] : memref<8x32xf32, #tpu.memory_space<vmem>>, vector<8x32xf32>
      tpu.vector_store %arg5[%c0_9, %c0_10], %21 {strides = array<i32>} : memref<8x32xf32, #tpu.memory_space<vmem>>, vector<8x32xf32>,
    } else {
    }
    %c1_i32 = arith.constant 1 : i32
    %17 = arith.cmpi eq, %arg0, %c1_i32 : i32
    %18 = arith.extui %17 : i1 to i32
    %c0_i32_6 = arith.constant 0 : i32
    %19 = arith.cmpi ne, %18, %c0_i32_6 : i32
    scf.if %19 {
      %c0_7 = arith.constant 0 : index
      %c0_8 = arith.constant 0 : index
      %20 = vector.load %arg5[%c0_7, %c0_8] : memref<8x32xf32, #tpu.memory_space<vmem>>, vector<8x32xf32>
      %cst_9 = arith.constant 1.250000e-01 : f32
      %21 = vector.broadcast %cst_9 : f32 to vector<8x32xf32>
      %22 = arith.mulf %20, %21 : vector<8x32xf32>
      %cst_10 = arith.constant dense<0.000000e+00> : vector<32xf32>
      %23 = vector.multi_reduction <add>, %22, %cst_10 [0] : vector<8x32xf32> to vector<32xf32>
      %24 = vector.shape_cast %23 : vector<32xf32> to vector<1x32xf32>
      %cst_11 = arith.constant 1.250000e-01 : f32
      %25 = vector.broadcast %cst_11 : f32 to vector<1x32xf32>
      %26 = arith.mulf %24, %25 : vector<1x32xf32>
      %27 = vector.broadcast %26 : vector<1x32xf32> to vector<8x32xf32>
      %28 = arith.subf %22, %27 : vector<8x32xf32>
      %29 = arith.mulf %28, %28 : vector<8x32xf32>
      %cst_12 = arith.constant dense<0.000000e+00> : vector<32xf32>
      %30 = vector.multi_reduction <add>, %29, %cst_12 [0] : vector<8x32xf32> to vector<32xf32>
      %31 = vector.shape_cast %30 : vector<32xf32> to vector<1x32xf32>
      %cst_13 = arith.constant 1.250000e-01 : f32
      %32 = vector.broadcast %cst_13 : f32 to vector<1x32xf32>
      %33 = arith.mulf %31, %32 : vector<1x32xf32>
      %cst_14 = arith.constant 9.99999997E-7 : f32
      %34 = vector.broadcast %cst_14 : f32 to vector<1x32xf32>
      %35 = arith.addf %33, %34 : vector<1x32xf32>
      %36 = math.rsqrt %35 : vector<1x32xf32>
      %37 = vector.broadcast %36 : vector<1x32xf32> to vector<8x32xf32>
      %38 = arith.mulf %28, %37 : vector<8x32xf32>
      %c0_15 = arith.constant 0 : index
      %c0_16 = arith.constant 0 : index
      %39 = vector.load %arg2[%c0_15, %c0_16] : memref<32x128xf32, #tpu.memory_space<vmem>>, vector<32x128xf32>
      %cst_17 = arith.constant dense<0.000000e+00> : vector<8x128xf32>
      %40 = tpu.matmul %38, %39, %cst_17 {dimension_numbers = #tpu.dot_dimension_numbers<[1], [0], [0], [1], [0, 0, 1, 1], [], []>} : vector<8x32xf32>, vector<32x128xf32>, vector<8x128xf32> -> vector<8x128xf32>
      %c0_18 = arith.constant 0 : index
      %c0_19 = arith.constant 0 : index
      %41 = vector.load %arg3[%c0_18, %c0_19] : memref<1x128xf32, #tpu.memory_space<vmem>>, vector<1x128xf32>
      %42 = vector.broadcast %41 : vector<1x128xf32> to vector<8x128xf32>
      %43 = arith.addf %40, %42 : vector<8x128xf32>
      %c0_20 = arith.constant 0 : index
      %c0_21 = arith.constant 0 : index
      %44 = vector.load %arg4[%c0_20, %c0_21] : memref<8x128xf32, #tpu.memory_space<vmem>>, vector<8x128xf32>
      tpu.vector_store %arg4[%c0_20, %c0_21], %43 {strides = array<i32>} : memref<8x128xf32, #tpu.memory_space<vmem>>, vector<8x128xf32>,
    } else {
    }
    return
  }
  func.func @transform_0(%arg0: i32) -> (i32, i32, i32) {
    %c0_i32 = arith.constant 0 : i32
    %c0_i32_0 = arith.constant 0 : i32
    %c0_i32_1 = arith.constant 0 : i32
    return %c0_i32, %arg0, %c0_i32_0 : i32, i32, i32
  }
  func.func @transform_1(%arg0: i32) -> (i32, i32) {
    %c0_i32 = arith.constant 0 : i32
    %c0_i32_0 = arith.constant 0 : i32
    %c0_i32_1 = arith.constant 0 : i32
    return %c0_i32, %c0_i32_0 : i32, i32
  }
  func.func @transform_2(%arg0: i32) -> (i32, i32) {
    %c0_i32 = arith.constant 0 : i32
    %c0_i32_0 = arith.constant 0 : i32
    %c0_i32_1 = arith.constant 0 : i32
    return %c0_i32, %c0_i32_0 : i32, i32
  }
  func.func @transform_3(%arg0: i32) -> (i32, i32) {
    %c0_i32 = arith.constant 0 : i32
    %c0_i32_0 = arith.constant 0 : i32
    %c0_i32_1 = arith.constant 0 : i32
    return %c0_i32, %c0_i32_0 : i32, i32
  }
}

</mosaic_0001>

<llo_original>
// kernel: tpu_custom_call.1
$region0: #{tpu_custom_call.1}
  #allocation0 [shape = 'u32[]', space=smem, size = 0x4, offset = 0x4, fixed_abs, tag = 'smem constant byte address 0x4 - core index']
  #allocation1 [shape = 'u32[144,128]{1,0:T(1,128)}', space=vmem, size = 0x12000, scoped, tag = 'internal scratch']
  #allocation2 [shape = 'f32[8,32]{1,0:T(8,128)}', space=vmem, size = 0x1000, scoped, tag = 'scratch operand']
  %s0 = inlined_call_operand.vmem [shape: f32[8,9,32], index: 0, kind: input, shape index: {}]
  %s1 = inlined_call_operand.vmem [shape: f32[32,128], index: 1, kind: input, shape index: {}]
  %s2 = inlined_call_operand.vmem [shape: f32[1,128], index: 2, kind: input, shape index: {}]
  %s3 = inlined_call_operand.hbm [shape: f32[8,128], index: 3, kind: output, shape index: {}]
  %s4 = sld [smem:[#allocation0]]
  $region95: #{tpu_custom_call.1} parent=0
    _
  %s6 = ssub.s32 1, %s4
  %s7 = scalar_select 0, %s6, %s4
  $region1: #{tpu_custom_call.1} parent=0
    #allocation3 [shape = 'u8[65536]{0}', space=vmem, size = 0x10000, scoped, tag = 'input window, operand 0']
    #allocation4 [shape = 'u8[4096]{0}', space=vmem, size = 0x1000, scoped, tag = 'output window, operand 0, single buffered']
    #allocation5 [shape = 's32[2]{0}', space=sflag, size = 0x8, scoped, tag = 'scoped memory for tpu_custom_call.1']
    %8 = vsyncpa [#allocation5], 0
    loop: start=0, step=1, limit=4
    $region2: #{tpu_custom_call.1} parent=1 // loop_pre_header
      _
    $region3: #{tpu_custom_call.1} parent=1 // loop_header
      %s10 = sphi 0, %s14
      %p11 = scmp.ge.s32.totalorder %s10, 4
      %s20 = sphi 0, %s22
      %s23 = sphi 0, %s20
      %s24 = sphi 0, %s23
      %s40 = sphi 0, %s24
      %s44 = sphi 0, %s44
      %s46 = sphi 0, %s44
      %s47 = sphi 0, %s46
      %s61 = sphi 0, %s47
      %s65 = sphi 0, %s65
      %s67 = sphi 0, %s65
      %s68 = sphi 0, %s67
      %s82 = sphi 0, %s68
      %s86 = sphi 0, %s86
      %s88 = sphi 0, %s86
      %s89 = sphi 0, %s88
      %s103 = sphi 0, %s89
    $region4: #{tpu_custom_call.1} parent=1 // loop_header_branch
      %13 = sbr.rel (%p11) target = $region8
    $region5: #{tpu_custom_call.1} parent=1 // loop_body
      %s15 = ssub.s32 %s10, 1
      %s16 = ssub.s32 %s10, 2
      %s17 = sadd.s32 %s10, 1
      %s18 = ssub.s32 %s10, %s17
      %p19 = scmp.eq.s32.totalorder %s18, 0
      %s21 = sadd.s32 %s20, 1
      %s22 = scalar_select %p19, %s20, %s21
      %p25 = pneg %p19
      %p26 = scmp.eq.s32.totalorder %s10, 1
      %p27 = por %p25, %p26
      %p28 = scmp.ne.s32.totalorder %s20, %s23
      %p29 = scmp.eq.s32.totalorder %s10, 0
      %p30 = por %p28, %p29
      %p31 = scmp.ne.s32.totalorder %s20, %s23
      %p32 = scmp.eq.s32.totalorder %s15, 1
      %p33 = por %p31, %p32
      %p34 = scmp.ne.s32.totalorder %s23, %s24
      %p35 = scmp.eq.s32.totalorder %s15, 0
      %p36 = por %p34, %p35
      %p37 = scmp.ne.s32.totalorder %s23, %s24
      %p38 = scmp.eq.s32.totalorder %s16, 1
      %p39 = por %p37, %p38
      %p41 = scmp.ne.s32.totalorder %s24, %s40
      %p42 = scmp.eq.s32.totalorder %s16, 0
      %p43 = por %p41, %p42
      %s45 = sadd.s32 %s44, 1
      %p48 = scmp.eq.s32.totalorder %s10, 1
      %p49 = scmp.ne.s32.totalorder %s44, %s46
      %p50 = scmp.eq.s32.totalorder %s10, 0
      %p51 = por %p49, %p50
      %p52 = scmp.ne.s32.totalorder %s44, %s46
      %p53 = scmp.eq.s32.totalorder %s15, 1
      %p54 = por %p52, %p53
      %p55 = scmp.ne.s32.totalorder %s46, %s47
      %p56 = scmp.eq.s32.totalorder %s15, 0
      %p57 = por %p55, %p56
      %p58 = scmp.ne.s32.totalorder %s46, %s47
      %p59 = scmp.eq.s32.totalorder %s16, 1
      %p60 = por %p58, %p59
      %p62 = scmp.ne.s32.totalorder %s47, %s61
      %p63 = scmp.eq.s32.totalorder %s16, 0
      %p64 = por %p62, %p63
      %s66 = sadd.s32 %s65, 1
      %p69 = scmp.eq.s32.totalorder %s10, 1
      %p70 = scmp.ne.s32.totalorder %s65, %s67
      %p71 = scmp.eq.s32.totalorder %s10, 0
      %p72 = por %p70, %p71
      %p73 = scmp.ne.s32.totalorder %s65, %s67
      %p74 = scmp.eq.s32.totalorder %s15, 1
      %p75 = por %p73, %p74
      %p76 = scmp.ne.s32.totalorder %s67, %s68
      %p77 = scmp.eq.s32.totalorder %s15, 0
      %p78 = por %p76, %p77
      %p79 = scmp.ne.s32.totalorder %s67, %s68
      %p80 = scmp.eq.s32.totalorder %s16, 1
      %p81 = por %p79, %p80
      %p83 = scmp.ne.s32.totalorder %s68, %s82
      %p84 = scmp.eq.s32.totalorder %s16, 0
      %p85 = por %p83, %p84
      %s87 = sadd.s32 %s86, 1
      %p90 = scmp.eq.s32.totalorder %s10, 1
      %p91 = scmp.ne.s32.totalorder %s86, %s88
      %p92 = scmp.eq.s32.totalorder %s10, 0
      %p93 = por %p91, %p92
      %p94 = scmp.ne.s32.totalorder %s86, %s88
      %p95 = scmp.eq.s32.totalorder %s15, 1
      %p96 = por %p94, %p95
      %p97 = scmp.ne.s32.totalorder %s88, %s89
      %p98 = scmp.eq.s32.totalorder %s15, 0
      %p99 = por %p97, %p98
      %p100 = scmp.ne.s32.totalorder %s88, %s89
      %p101 = scmp.eq.s32.totalorder %s16, 1
      %p102 = por %p100, %p101
      %p104 = scmp.ne.s32.totalorder %s89, %s103
      %p105 = scmp.eq.s32.totalorder %s16, 0
      %p106 = por %p104, %p105
      %p107 = scmp.le.s32.totalorder 1, %s10
      %p108 = scmp.lt.s32.totalorder %s10, 3
      %p109 = pnand %p107, %p108
      %p110 = pneg %p109
      // Predicated region
      $region9: #{tpu_custom_call.1} parent=5 // pred_check
        _
      $region10: #{tpu_custom_call.1} parent=5 // pred_check_branch
        %112 = sbr.rel (%p109) target = $region12
      $region11: #{tpu_custom_call.1} parent=5 // pred_region
        %s113 = ssub.s32 %s10, 1
        // Predicated region
        $region13: #{tpu_custom_call.1} parent=11 // pred_check
          %p114 = pneg %p57
        $region14: #{tpu_custom_call.1} parent=11 // pred_check_branch
          %116 = sbr.rel (%p114) target = $region16
        $region15: #{tpu_custom_call.1} parent=11 // pred_region
          _
        $region16: #{tpu_custom_call.1} parent=11 // pred_fallthru
          _
        // Predicated region
        $region17: #{tpu_custom_call.1} parent=11 // pred_check
          %p117 = pneg %p78
        $region18: #{tpu_custom_call.1} parent=11 // pred_check_branch
          %119 = sbr.rel (%p117) target = $region20
        $region19: #{tpu_custom_call.1} parent=11 // pred_region
          _
        $region20: #{tpu_custom_call.1} parent=11 // pred_fallthru
          _
      $region12: #{tpu_custom_call.1} parent=5 // pred_fallthru
        _
      %p120 = scmp.lt.s32.totalorder %s10, 2
      // Predicated region
      $region21: #{tpu_custom_call.1} parent=5 // pred_check
        %p121 = pneg %p120
      $region22: #{tpu_custom_call.1} parent=5 // pred_check_branch
        %123 = sbr.rel (%p121) target = $region24
      $region23: #{tpu_custom_call.1} parent=5 // pred_region
        // Predicated region
        $region25: #{tpu_custom_call.1} parent=23 // pred_check
          %p124 = pneg %p30
        $region26: #{tpu_custom_call.1} parent=23 // pred_check_branch
          %126 = sbr.rel (%p124) target = $region28
        $region27: #{tpu_custom_call.1} parent=23 // pred_region
          %s127 = sand.u32 %s20, 1
          %s128 = sand.u32 %s20, 1
          %s129 = smul.addr %s128, 64
          %s130 = scalar_lea.vmem [#allocation3], %s129
          %s131 = smul.addr %s10, 8
          %s132 = scalar_lea.vmem %s0, %s131
          // Predicated region
          $region29: #{tpu_custom_call.1} parent=27 // pred_check
            _
          $region30: #{tpu_custom_call.1} parent=27 // pred_check_branch
            %134 = sbr.rel (0) target = $region32
          $region31: #{tpu_custom_call.1} parent=27 // pred_region
            // Predicated region
            $region33: #{tpu_custom_call.1} parent=31 // pred_check
              _
            $region34: #{tpu_custom_call.1} parent=31 // pred_check_branch
              %136 = sbr.rel (0) target = $region36
            $region35: #{tpu_custom_call.1} parent=31 // pred_region
              // Predicated region
              $region48: #{tpu_custom_call.1} parent=35 // pred_check
                _
              $region49: #{tpu_custom_call.1} parent=35 // pred_check_branch
                %165 = sbr.rel (0) target = $region51
              $region50: #{tpu_custom_call.1} parent=35 // pred_region
                loop: start=0, step=1, limit=1
                $region52: #{tpu_custom_call.1} parent=50 // loop_pre_header
                  _
                $region53: #{tpu_custom_call.1} parent=50 // loop_header
                  %s167 = sphi 0, %s171
                  %p168 = scmp.ge.s32.totalorder %s167, 1
                  %s172 = sphi %s132, %s132
                  %s173 = sphi %s130, %s130
                $region54: #{tpu_custom_call.1} parent=50 // loop_header_branch
                  %170 = sbr.rel (%p168) target = $region58
                $region55: #{tpu_custom_call.1} parent=50 // loop_body
                  %v174 = vld [vmem:[%s172] sm:$0xff]
                  %175 = vst [vmem:[%s173] sm:$0xff] %v174
                  %v176 = vld [vmem:[%s172 + $0x10] sm:$0xff]
                  %177 = vst [vmem:[%s173 + $0x8] sm:$0xff] %v176
                  %v178 = vld [vmem:[%s172 + $0x20] sm:$0xff]
                  %179 = vst [vmem:[%s173 + $0x10] sm:$0xff] %v178
                  %v180 = vld [vmem:[%s172 + $0x30] sm:$0xff]
                  %181 = vst [vmem:[%s173 + $0x18] sm:$0xff] %v180
                  %v182 = vld [vmem:[%s172 + $0x40] sm:$0xff]
                  %183 = vst [vmem:[%s173 + $0x20] sm:$0xff] %v182
                  %v184 = vld [vmem:[%s172 + $0x50] sm:$0xff]
                  %185 = vst [vmem:[%s173 + $0x28] sm:$0xff] %v184
                  %v186 = vld [vmem:[%s172 + $0x60] sm:$0xff]
                  %187 = vst [vmem:[%s173 + $0x30] sm:$0xff] %v186
                  %v188 = vld [vmem:[%s172 + $0x70] sm:$0xff]
                  %189 = vst [vmem:[%s173 + $0x38] sm:$0xff] %v188
                $region56: #{tpu_custom_call.1} parent=50 // loop_footer
                  %s171 = sadd.s32 1, %s167
                $region57: #{tpu_custom_call.1} parent=50 // loop_footer_branch
                  %166 = sbr.rel target = $region53
                $region58: #{tpu_custom_call.1} parent=50 // loop_exit
                  _
              $region51: #{tpu_custom_call.1} parent=35 // pred_fallthru
                _
              // Predicated region
              $region59: #{tpu_custom_call.1} parent=35 // pred_check
                _
              $region60: #{tpu_custom_call.1} parent=35 // pred_check_branch
                %191 = sbr.rel target = $region62
              $region61: #{tpu_custom_call.1} parent=35 // pred_region
                _
              $region62: #{tpu_custom_call.1} parent=35 // pred_fallthru
                _
            $region36: #{tpu_custom_call.1} parent=31 // pred_fallthru
              _
            // Predicated region
            $region37: #{tpu_custom_call.1} parent=31 // pred_check
              _
            $region38: #{tpu_custom_call.1} parent=31 // pred_check_branch
              %138 = sbr.rel target = $region40
            $region39: #{tpu_custom_call.1} parent=31 // pred_region
              loop: start=0, step=1, limit=1
              $region41: #{tpu_custom_call.1} parent=39 // loop_pre_header
                _
              $region42: #{tpu_custom_call.1} parent=39 // loop_header
                %s141 = sphi 0, %s145
                %p142 = scmp.ge.s32.totalorder %s141, 1
                %s146 = sphi %s132, %s132
                %s147 = sphi %s130, %s130
              $region43: #{tpu_custom_call.1} parent=39 // loop_header_branch
                %144 = sbr.rel (%p142) target = $region47
              $region44: #{tpu_custom_call.1} parent=39 // loop_body
                %v148 = vld [vmem:[%s146] sm:$0xff]
                %149 = vst [vmem:[%s147] sm:$0xff] %v148
                %v150 = vld [vmem:[%s146 + $0x10] sm:$0xff]
                %151 = vst [vmem:[%s147 + $0x8] sm:$0xff] %v150
                %v152 = vld [vmem:[%s146 + $0x20] sm:$0xff]
                %153 = vst [vmem:[%s147 + $0x10] sm:$0xff] %v152
                %v154 = vld [vmem:[%s146 + $0x30] sm:$0xff]
                %155 = vst [vmem:[%s147 + $0x18] sm:$0xff] %v154
                %v156 = vld [vmem:[%s146 + $0x40] sm:$0xff]
                %157 = vst [vmem:[%s147 + $0x20] sm:$0xff] %v156
                %v158 = vld [vmem:[%s146 + $0x50] sm:$0xff]
                %159 = vst [vmem:[%s147 + $0x28] sm:$0xff] %v158
                %v160 = vld [vmem:[%s146 + $0x60] sm:$0xff]
                %161 = vst [vmem:[%s147 + $0x30] sm:$0xff] %v160
                %v162 = vld [vmem:[%s146 + $0x70] sm:$0xff]
                %163 = vst [vmem:[%s147 + $0x38] sm:$0xff] %v162
              $region45: #{tpu_custom_call.1} parent=39 // loop_footer
                %s145 = sadd.s32 1, %s141
              $region46: #{tpu_custom_call.1} parent=39 // loop_footer_branch
                %140 = sbr.rel target = $region42
              $region47: #{tpu_custom_call.1} parent=39 // loop_exit
                _
            $region40: #{tpu_custom_call.1} parent=31 // pred_fallthru
              _
          $region32: #{tpu_custom_call.1} parent=27 // pred_fallthru
            _
          %192 = vnop
        $region28: #{tpu_custom_call.1} parent=23 // pred_fallthru
          _
      $region24: #{tpu_custom_call.1} parent=5 // pred_fallthru
        _
      %p193 = scmp.le.s32.totalorder 1, %s10
      %p194 = scmp.lt.s32.totalorder %s10, 3
      %p195 = pnand %p193, %p194
      %p196 = pneg %p195
      // Predicated region
      $region63: #{tpu_custom_call.1} parent=5 // pred_check
        _
      $region64: #{tpu_custom_call.1} parent=5 // pred_check_branch
        %198 = sbr.rel (%p195) target = $region66
      $region65: #{tpu_custom_call.1} parent=5 // pred_region
        %s199 = ssub.s32 %s10, 1
        %s200 = sand.u32 %s23, 1
        %s201 = sand.u32 %s23, 1
        %s202 = smul.addr %s201, 64
        %s203 = scalar_lea.vmem [#allocation3], %s202
        // Predicated region
        $region67: #{tpu_custom_call.1} parent=65 // pred_check
          %p204 = pneg %p36
        $region68: #{tpu_custom_call.1} parent=65 // pred_check_branch
          %206 = sbr.rel (%p204) target = $region70
        $region69: #{tpu_custom_call.1} parent=65 // pred_region
          _
        $region70: #{tpu_custom_call.1} parent=65 // pred_fallthru
          _
        %s207 = sand.u32 %s23, 1
        %s208 = sand.u32 %s23, 1
        %s209 = smul.addr %s208, 64
        %s210 = scalar_lea.vmem [#allocation3], %s209
        %p211 = pneg %p36
        %p212 = pneg %p33
        %p213 = pneg %p57
        %p214 = pneg %p54
        %p215 = pneg %p78
        %p216 = pneg %p75
        %p217 = pneg %p99
        %p218 = pneg %p96
        %v219 = vld [vmem:[%s203] sm:$0xff]
        %v220 = vld [vmem:[%s203 + $0x8] sm:$0xff]
        %v221 = vld [vmem:[%s203 + $0x10] sm:$0xff]
        %v222 = vld [vmem:[%s203 + $0x18] sm:$0xff]
        %v223 = vld [vmem:[%s203 + $0x20] sm:$0xff]
        %v224 = vld [vmem:[%s203 + $0x28] sm:$0xff]
        %v225 = vld [vmem:[%s203 + $0x30] sm:$0xff]
        %v226 = vld [vmem:[%s203 + $0x38] sm:$0xff]
        %v227 = vlaneseq
        %v228 = vshrl.u32 %v227, 7
        %s229 = smul.u32 %s15, 8
        %s230 = ssub.s32 9, %s229
        %v231 = vstv %s230
        %vm232 = vcmp.lt.s32.totalorder %v228, %v231
        %v233 = vsel %vm232, 1, 0
        %vm234 = vcmp.eq.s32.totalorder %v233, 1
        %v235 = vsel %vm234, %v219, 0.0
        %v236 = vsel %vm234, %v220, 0.0
        %v237 = vsel %vm234, %v221, 0.0
        %v238 = vsel %vm234, %v222, 0.0
        %v239 = vsel %vm234, %v223, 0.0
        %v240 = vsel %vm234, %v224, 0.0
        %v241 = vsel %vm234, %v225, 0.0
        %v242 = vsel %vm234, %v226, 0.0
        %vm243 = vcmask 261120
        %v244 = vsel %vm243, %v235, 0.0
        %v245 = vrot.slane %v244, 4
        %v246 = vadd.f32 %v244, %v245
        %v247 = vrot.slane %v246, 2
        %v248 = vadd.f32 %v246, %v247
        %v249 = vrot.slane %v248, 1
        %v250 = vadd.f32 %v248, %v249
        %v251 = vsel %vm243, %v236, 0.0
        %v252 = vrot.slane %v251, 4
        %v253 = vadd.f32 %v251, %v252
        %v254 = vrot.slane %v253, 2
        %v255 = vadd.f32 %v253, %v254
        %v256 = vrot.slane %v255, 1
        %v257 = vadd.f32 %v255, %v256
        %v258 = vsel %vm243, %v237, 0.0
        %v259 = vrot.slane %v258, 4
        %v260 = vadd.f32 %v258, %v259
        %v261 = vrot.slane %v260, 2
        %v262 = vadd.f32 %v260, %v261
        %v263 = vrot.slane %v262, 1
        %v264 = vadd.f32 %v262, %v263
        %v265 = vsel %vm243, %v238, 0.0
        %v266 = vrot.slane %v265, 4
        %v267 = vadd.f32 %v265, %v266
        %v268 = vrot.slane %v267, 2
        %v269 = vadd.f32 %v267, %v268
        %v270 = vrot.slane %v269, 1
        %v271 = vadd.f32 %v269, %v270
        %v272 = vsel %vm243, %v239, 0.0
        %v273 = vrot.slane %v272, 4
        %v274 = vadd.f32 %v272, %v273
        %v275 = vrot.slane %v274, 2
        %v276 = vadd.f32 %v274, %v275
        %v277 = vrot.slane %v276, 1
        %v278 = vadd.f32 %v276, %v277
        %v279 = vsel %vm243, %v240, 0.0
        %v280 = vrot.slane %v279, 4
        %v281 = vadd.f32 %v279, %v280
        %v282 = vrot.slane %v281, 2
        %v283 = vadd.f32 %v281, %v282
        %v284 = vrot.slane %v283, 1
        %v285 = vadd.f32 %v283, %v284
        %v286 = vsel %vm243, %v241, 0.0
        %v287 = vrot.slane %v286, 4
        %v288 = vadd.f32 %v286, %v287
        %v289 = vrot.slane %v288, 2
        %v290 = vadd.f32 %v288, %v289
        %v291 = vrot.slane %v290, 1
        %v292 = vadd.f32 %v290, %v291
        %v293 = vsel %vm243, %v242, 0.0
        %v294 = vrot.slane %v293, 4
        %v295 = vadd.f32 %v293, %v294
        %v296 = vrot.slane %v295, 2
        %v297 = vadd.f32 %v295, %v296
        %v298 = vrot.slane %v297, 1
        %v299 = vadd.f32 %v297, %v298
        %p300 = scmp.eq.s32.totalorder %s15, 0
        // Predicated region
        $region71: #{tpu_custom_call.1} parent=65 // pred_check
          %p301 = pneg %p300
        $region72: #{tpu_custom_call.1} parent=65 // pred_check_branch
          %303 = sbr.rel (%p301) target = $region74
        $region73: #{tpu_custom_call.1} parent=65 // pred_region
          %v304 = vld [vmem:[%s203] sm:$0x1]
          %v305 = vld [vmem:[%s203 + $0x8] sm:$0x1]
          %v306 = vld [vmem:[%s203 + $0x10] sm:$0x1]
          %v307 = vld [vmem:[%s203 + $0x18] sm:$0x1]
          %v308 = vld [vmem:[%s203 + $0x20] sm:$0x1]
          %v309 = vld [vmem:[%s203 + $0x28] sm:$0x1]
          %v310 = vld [vmem:[%s203 + $0x30] sm:$0x1]
          %v311 = vld [vmem:[%s203 + $0x38] sm:$0x1]
          %v312 = vsub.f32 %v250, %v304
          %v313 = vsub.f32 %v257, %v305
          %v314 = vsub.f32 %v264, %v306
          %v315 = vsub.f32 %v271, %v307
          %v316 = vsub.f32 %v278, %v308
          %v317 = vsub.f32 %v285, %v309
          %v318 = vsub.f32 %v292, %v310
          %v319 = vsub.f32 %v299, %v311
          %v328 = vrot.slane %v313, 7
          %vm329 = vcmask 1041409
          %v330 = vsel %vm329, %v328, %v312
          %v331 = vrot.slane %v314, 6
          %vm332 = vcmask 1042434
          %v333 = vsel %vm332, %v331, %v330
          %v334 = vrot.slane %v315, 5
          %vm335 = vcmask 1043459
          %v336 = vsel %vm335, %v334, %v333
          %v337 = vrot.slane %v316, 4
          %vm338 = vcmask 1044484
          %v339 = vsel %vm338, %v337, %v336
          %v340 = vrot.slane %v317, 3
          %vm341 = vcmask 1045509
          %v342 = vsel %vm341, %v340, %v339
          %v343 = vrot.slane %v318, 2
          %vm344 = vcmask 1046534
          %v345 = vsel %vm344, %v343, %v342
          %v346 = vrot.slane %v319, 1
          %vm347 = vcmask 1047559
          %v348 = vsel %vm347, %v346, %v345
          %350 = vst.msk [vmem:[#allocation2] sm:$0xff] %vm243, %v348
        $region74: #{tpu_custom_call.1} parent=65 // pred_fallthru
          _
        %p351 = scmp.gt.s32.totalorder %s15, 0
        // Predicated region
        $region75: #{tpu_custom_call.1} parent=65 // pred_check
          %p352 = pneg %p351
        $region76: #{tpu_custom_call.1} parent=65 // pred_check_branch
          %354 = sbr.rel (%p352) target = $region78
        $region77: #{tpu_custom_call.1} parent=65 // pred_region
          %v355 = vld [vmem:[#allocation2] sm:$0xff]
          %vm364 = vcmask 1041409
          %v365 = vsel %vm364, %v257, %v250
          %vm366 = vcmask 1042434
          %v367 = vsel %vm366, %v264, %v365
          %vm368 = vcmask 1043459
          %v369 = vsel %vm368, %v271, %v367
          %vm370 = vcmask 1044484
          %v371 = vsel %vm370, %v278, %v369
          %vm372 = vcmask 1045509
          %v373 = vsel %vm372, %v285, %v371
          %vm374 = vcmask 1046534
          %v375 = vsel %vm374, %v292, %v373
          %vm376 = vcmask 1047559
          %v377 = vsel %vm376, %v299, %v375
          %v379 = vadd.f32 %v355, %v377
          %380 = vst.msk [vmem:[#allocation2] sm:$0xff] %vm243, %v379
        $region78: #{tpu_custom_call.1} parent=65 // pred_fallthru
          _
        %p381 = scmp.eq.s32.totalorder %s15, 1
        // Predicated region
        $region79: #{tpu_custom_call.1} parent=65 // pred_check
          %p382 = pneg %p381
        $region80: #{tpu_custom_call.1} parent=65 // pred_check_branch
          %384 = sbr.rel (%p382) target = $region82
        $region81: #{tpu_custom_call.1} parent=65 // pred_region
          %v385 = vld [vmem:[#allocation2] sm:$0xff]
          %v386 = vmul.f32 %v385, 0.125
          %v387 = vsel %vm243, %v386, 0.0
          %v388 = vrot.slane %v387, 4
          %v389 = vadd.f32 %v387, %v388
          %v390 = vrot.slane %v389, 2
          %v391 = vadd.f32 %v389, %v390
          %v392 = vrot.slane %v391, 1
          %v393 = vadd.f32 %v391, %v392
          %v394 = vmul.f32 %v393, 0.125
          %v395 = vsub.f32 %v386, %v394
          %v396 = vmul.f32 %v395, %v395
          %v397 = vsel %vm243, %v396, 0.0
          %v398 = vrot.slane %v397, 4
          %v399 = vadd.f32 %v397, %v398
          %v400 = vrot.slane %v399, 2
          %v401 = vadd.f32 %v399, %v400
          %v402 = vrot.slane %v401, 1
          %v403 = vadd.f32 %v401, %v402
          %v404 = vmul.f32 %v403, 0.125
          %v405 = vadd.f32 %v404, 1e-06
          %v406 = vrsqrt.pop %v405
          %v407 = vmul.f32 %v395, %v406
          %v408 = vld [vmem:[%s1] sm:$0xff]
          %v409 = vld [vmem:[%s1 + $0x8] sm:$0xff]
          %v410 = vld [vmem:[%s1 + $0x10] sm:$0xff]
          %v411 = vld [vmem:[%s1 + $0x18] sm:$0xff]
          %v412 = vld [vmem:[%s2] sm:$0x1]
          %v414 = vlaneseq
          %v415 = vshrl.u32 %v414, 7
          %v416 = vsub.s32 0, %v415
          %v417 = vrot.slane %v412, %v416
          %v420 = vsel %vm243, %v407, 0
          %422 = vmatprep.subr.mxu0 0.0
          %423 = vmatpush1.msra.mxu0 %v408
          %424 = vmatprep.subr.mxu0 0.0
          %425 = vmatpush1.msra.mxu0 %v409
          %426 = vmatprep.subr.mxu0 0.0
          %427 = vmatpush1.msra.mxu0 %v410
          %428 = vmatprep.subr.mxu0 0.0
          %429 = vmatpush1.msra.mxu0 %v411
          %430 = vmatprep.subr.mxu0 0.0
          %431 = vmatpush1.msra.mxu0 0.0
          %432 = vmatprep.subr.mxu0 0.0
          %433 = vmatpush1.msra.mxu0 0.0
          %434 = vmatprep.subr.mxu0 0.0
          %435 = vmatpush1.msra.mxu0 0.0
          %436 = vmatprep.subr.mxu0 0.0
          %437 = vmatpush1.msra.mxu0 0.0
          %438 = vmatprep.subr.mxu0 0.0
          %439 = vmatpush1.msra.mxu0 0.0
          %440 = vmatprep.subr.mxu0 0.0
          %441 = vmatpush1.msra.mxu0 0.0
          %442 = vmatprep.subr.mxu0 0.0
          %443 = vmatpush1.msra.mxu0 0.0
          %444 = vmatprep.subr.mxu0 0.0
          %445 = vmatpush1.msra.mxu0 0.0
          %446 = vmatprep.subr.mxu0 0.0
          %447 = vmatpush1.msra.mxu0 0.0
          %448 = vmatprep.subr.mxu0 0.0
          %449 = vmatpush1.msra.mxu0 0.0
          %450 = vmatprep.subr.mxu0 0.0
          %451 = vmatpush1.msra.mxu0 0.0
          %452 = vmatprep.subr.mxu0 0.0
          %453 = vmatpush1.msra.mxu0 0.0
          %454 = vmatprep.subr.mxu0 0.0
          %455 = vmatpush1.msra.mxu0 0.0
          %456 = vmatprep.subr.mxu0 0.0
          %457 = vmatpush1.msra.mxu0 0.0
          %458 = vmatprep.subr.mxu0 0.0
          %459 = vmatpush1.msra.mxu0 0.0
          %460 = vmatprep.subr.mxu0 0.0
          %461 = vmatpush1.msra.mxu0 0.0
          %462 = vmatprep.subr.mxu0 0.0
          %463 = vmatpush1.msra.mxu0 0.0
          %464 = vmatprep.subr.mxu0 0.0
          %465 = vmatpush1.msra.mxu0 0.0
          %466 = vmatprep.subr.mxu0 0.0
          %467 = vmatpush1.msra.mxu0 0.0
          %468 = vmatprep.subr.mxu0 0.0
          %469 = vmatpush1.msra.mxu0 0.0
          %470 = vmatprep.subr.mxu0 0.0
          %471 = vmatpush1.msra.mxu0 0.0
          %472 = vmatprep.subr.mxu0 0.0
          %473 = vmatpush1.msra.mxu0 0.0
          %474 = vmatprep.subr.mxu0 0.0
          %475 = vmatpush1.msra.mxu0 0.0
          %476 = vmatprep.subr.mxu0 0.0
          %477 = vmatpush1.msra.mxu0 0.0
          %478 = vmatprep.subr.mxu0 0.0
          %479 = vmatpush1.msra.mxu0 0.0
          %480 = vmatprep.subr.mxu0 0.0
          %481 = vmatpush1.msra.mxu0 0.0
          %482 = vmatprep.subr.mxu0 0.0
          %483 = vmatpush1.msra.mxu0 0.0
          %484 = vmatprep.subr.mxu0 0.0
          %485 = vmatpush1.msra.mxu0 0.0
          %486 = vmatprep.mubr.f32.mxu0 0.0
          %487 = vmatmul.mubr.f32.gmra.mrb[0].mxu0 %v420
          %v488 = vpop.f32.mrb[0].mxu0
          %v489 = vadd.f32 %v417, %v488
          %v490 = vpop.f32.mrb[0].mxu0
          %491 = vdwg.mxu0
          %492 = vst [vmem:[#allocation4] sm:$0xff] %v489
        $region82: #{tpu_custom_call.1} parent=65 // pred_fallthru
          _
        // Predicated region
        $region83: #{tpu_custom_call.1} parent=65 // pred_check
          %p493 = pneg %p96
        $region84: #{tpu_custom_call.1} parent=65 // pred_check_branch
          %495 = sbr.rel (%p493) target = $region86
        $region85: #{tpu_custom_call.1} parent=65 // pred_region
          %s497 = ssub.s32 128, 128
          %498 = vsyncadd [#allocation5], %s497
          %s500 = sshll.u32 [#allocation4], 4
          %s501 = int_to_ptr.vmem [resolvable:$true] %s500
          %503 = dma.vmem_to_hbm [thread:$0]  %s501, 128, %s3, [#allocation5]
        $region86: #{tpu_custom_call.1} parent=65 // pred_fallthru
          _
        // Predicated region
        $region87: #{tpu_custom_call.1} parent=65 // pred_check
          %p504 = pneg %p96
        $region88: #{tpu_custom_call.1} parent=65 // pred_check_branch
          %506 = sbr.rel (%p504) target = $region90
        $region89: #{tpu_custom_call.1} parent=65 // pred_region
          %507 = dma.done [#allocation5], 128
        $region90: #{tpu_custom_call.1} parent=65 // pred_fallthru
          _
      $region66: #{tpu_custom_call.1} parent=5 // pred_fallthru
        _
      %p508 = scmp.le.s32.totalorder 2, %s10
      // Predicated region
      $region91: #{tpu_custom_call.1} parent=5 // pred_check
        %p509 = pneg %p508
      $region92: #{tpu_custom_call.1} parent=5 // pred_check_branch
        %511 = sbr.rel (%p509) target = $region94
      $region93: #{tpu_custom_call.1} parent=5 // pred_region
        %s512 = ssub.s32 %s10, 2
      $region94: #{tpu_custom_call.1} parent=5 // pred_fallthru
        _
    $region6: #{tpu_custom_call.1} parent=1 // loop_footer
      %s14 = sadd.s32 1, %s10
    $region7: #{tpu_custom_call.1} parent=1 // loop_footer_branch
      %9 = sbr.rel target = $region3
    $region8: #{tpu_custom_call.1} parent=1 // loop_exit
      _
    %513 = vsyncpa [#allocation5], 1
    %s514 = scalar_lea.sflag [#allocation5], 1
    %515 = vsyncpa %s514, 1

</llo_original>
